<compile_context>
chip_gen: v6e
topology: v6e:2x2x1
jax: 0.10.0
libtpu: 0.0.40
codegen_flags: <defaults>
</compile_context>

<pallas_src>
import jax
import jax.numpy as jnp
from jax.experimental import pallas as pl
from jax.experimental.pallas import tpu as pltpu


def _round_up(x, m):
    return ((x + m - 1) // m) * m


def _choose_tile(n, d, tile_n):
    """Token-tile height: large (amortize grid-step overhead) but VMEM-safe."""
    tile_n = max(8, (int(tile_n) // 8) * 8)
    tn = min(tile_n, _round_up(n, 8))
    # keep one (tn, d) f32 block under ~1 MiB so double-buffered in/out tiles
    # plus the stacked intermediates stay well inside the default scoped VMEM
    # on every generation (v5e's 16 MiB default is the tightest).
    cap = max(8, (((1 << 20) // max(4 * d, 1)) // 8) * 8)
    return max(8, min(tn, cap))


# -----------------------------------------------------------------------------
# Pallas kernel: feature-fusion attention over the 2 embeddings per token.
# -----------------------------------------------------------------------------
def _fefus_kernel(loc_ref, tim_ref, w1_ref, b1_ref, w2_ref, out_ref):
    # loc_ref/tim_ref : (TN, D)  f32 token tiles of the flattened B*Len axis
    # w1_ref          : (D, H)   first Linear weight, hidden 10 zero-padded to H=128
    # b1_ref, w2_ref  : (1, H)   zero-padded bias / second Linear weight
    loc = loc_ref[...].astype(jnp.float32)
    tim = tim_ref[...].astype(jnp.float32)
    tn = loc.shape[0]

    # attention scores for both embeddings in a single MXU pass
    e = jnp.concatenate([loc, tim], axis=0)                         # (2*TN, D)
    h = jnp.maximum(
        jnp.dot(e, w1_ref[...], preferred_element_type=jnp.float32)
        + b1_ref[...], 0.0)                                         # (2*TN, H)
    a = jnp.sum(h * w2_ref[...], axis=-1, keepdims=True)            # (2*TN, 1)
    a_loc = a[:tn]
    a_tim = a[tn:]

    # 2-way softmax == logistic (b2 cancels): one EUP exp + one EUP reciprocal.
    w_loc = pl.reciprocal(1.0 + jnp.exp(a_tim - a_loc))             # (TN, 1)
    w_tim = 1.0 - w_loc

    # bmm(attn, input) == weighted sum of the two embeddings
    out_ref[...] = (w_loc * loc + w_tim * tim).astype(out_ref.dtype)


def fefus_attention_pallas(loc_emb, tim_emb, w1, b1, w2, *, tile_n=1024):
    """loc_emb/tim_emb: (N, D) f32.  Returns the (N, D) fused representation."""
    n, d = loc_emb.shape
    hid = w1.shape[1]
    tn = _choose_tile(n, d, tile_n)
    n_pad = _round_up(n, tn)
    if n_pad != n:
        # cold path: EncoderPallas pre-pads at the (cheap) index level, so this
        # full-slab pad copy is normally never taken.
        pad = ((0, n_pad - n), (0, 0))
        loc_emb = jnp.pad(loc_emb, pad)
        tim_emb = jnp.pad(tim_emb, pad)

    out = pl.pallas_call(
        _fefus_kernel,
        out_shape=jax.ShapeDtypeStruct((n_pad, d), jnp.float32),
        grid_spec=pltpu.PrefetchScalarGridSpec(
            num_scalar_prefetch=0,
            grid=(n_pad // tn,),
            in_specs=[
                pl.BlockSpec((tn, d), lambda i: (i, 0)),    # locEmb tile
                pl.BlockSpec((tn, d), lambda i: (i, 0)),    # timEmb tile
                pl.BlockSpec((d, hid), lambda i: (0, 0)),   # W1 (stays resident)
                pl.BlockSpec((1, hid), lambda i: (0, 0)),   # b1
                pl.BlockSpec((1, hid), lambda i: (0, 0)),   # w2
            ],
            out_specs=pl.BlockSpec((tn, d), lambda i: (i, 0)),
        ),
        compiler_params=pltpu.CompilerParams(
            dimension_semantics=("parallel",)),
    )(loc_emb, tim_emb, w1, b1, w2)
    return out if n_pad == n else out[:n]


# -----------------------------------------------------------------------------
# Encoder module (parameters initialized deterministically in-script)
# -----------------------------------------------------------------------------
class EncoderPallas:
    HID_RAW = 10     # Attention.output_Dim in the PyTorch module
    HID_PAD = 128    # lane-aligned padding of the tiny hidden dim (keep >= 128)

    def __init__(self, emb, headNum, hiddenSize, Len, key, tile_n=1024):
        self.locEmbDim = emb["locEmbDim"]
        self.TemporalEmbDim = emb["TemporalEmbDim"]
        self.locationSize = emb["locationSize"]
        self.Len = Len
        self.headNum = headNum
        self.tile_n = tile_n
        assert self.locEmbDim == self.TemporalEmbDim == hiddenSize, (
            "forward() attention over [locEmb, timEmb] requires equal dims")

        k = jax.random.split(key, 6)
        d = hiddenSize
        # Embedding tables (f32; the PyTorch forward casts to f32 anyway).
        self.loc_table = jax.random.normal(
            k[0], (self.locationSize, d), jnp.float32)
        self.tim_table = jax.random.normal(k[1], (169, d), jnp.float32)
        # FeFusAttention params: Linear(d, 10) -> ReLU -> Linear(10, 1)
        w1 = jax.random.normal(k[2], (d, self.HID_RAW), jnp.float32) * 0.1
        b1 = jax.random.normal(k[3], (self.HID_RAW,), jnp.float32) * 0.1
        w2 = jax.random.normal(k[4], (self.HID_RAW,), jnp.float32) * 0.1
        self.b2 = jax.random.normal(k[5], ()) * 0.1   # cancels in the softmax
        hp = self.HID_PAD
        # zero-padding is exact: padded cols give relu(0)=0 and carry zero w2.
        self.w1 = jnp.zeros((d, hp), jnp.float32).at[:, : self.HID_RAW].set(w1)
        self.b1 = jnp.zeros((1, hp), jnp.float32).at[0, : self.HID_RAW].set(b1)
        self.w2 = jnp.zeros((1, hp), jnp.float32).at[0, : self.HID_RAW].set(w2)

    def __call__(self, x, usrOneHot, locOneHot, validLen=None, maskPer=None,
                 device=None, mode=None):
        # usrOneHot.argmax(-1), validLen, maskPer, mode are dead code in forward().
        b, length = locOneHot.shape[0], locOneHot.shape[1]
        d = self.locEmbDim
        n = b * length
        loc_idx = jnp.squeeze(locOneHot, -1).astype(jnp.int32).reshape(-1)
        tim_idx = x[:, :, 4].astype(jnp.int32).reshape(-1)

        tn = _choose_tile(n, d, self.tile_n)
        n_pad = _round_up(n, tn)
        if n_pad != n:
            # pad the (tiny) index vectors so the gathered slabs and the kernel
            # output are born padded; avoids full-slab pad copies.
            loc_idx = jnp.pad(loc_idx, (0, n_pad - n))
            tim_idx = jnp.pad(tim_idx, (0, n_pad - n))

        # Embedding gathers stay in XLA (HBM gather) — see TODO(synk) above.
        loc_emb = jnp.take(self.loc_table, loc_idx, axis=0)         # (n_pad, D)
        tim_emb = jnp.take(self.tim_table, tim_idx, axis=0)         # (n_pad, D)

        fused = fefus_attention_pallas(
            loc_emb, tim_emb, self.w1, self.b1, self.w2, tile_n=tn)
        if n_pad != n:
            fused = fused[:n]
        return fused.reshape(b, length, d)                          # PerLocRep

    # pure-JAX reference (faithful to the PyTorch forward, incl. the b2 term)
    def reference(self, x, usrOneHot, locOneHot):
        loc_idx = jnp.squeeze(locOneHot, -1).astype(jnp.int32)
        tim_idx = x[:, :, 4].astype(jnp.int32)
        loc_emb = self.loc_table[loc_idx].astype(jnp.float32)
        tim_emb = self.tim_table[tim_idx].astype(jnp.float32)

        def score(e):
            h = jnp.maximum(e @ self.w1 + self.b1, 0.0)
            return jnp.sum(h * self.w2, axis=-1, keepdims=True) + self.b2

        a = jnp.concatenate([score(loc_emb), score(tim_emb)], -1)
        w = jax.nn.softmax(a, axis=-1)
        return w[..., 0:1] * loc_emb + w[..., 1:2] * tim_emb


# -----------------------------------------------------------------------------
if __name__ == "__main__":
    # D=128 keeps the load/store path lane-dense (review item); shapes stay small.
    B, Len, D = 4, 64, 128
    emb = dict(locEmbDim=D, usrEmbDim=16, VisFreEmbDim=8, VisDurEmbDim=8,
               locOHDim=300, usrOHDim=12, TemporalEmbDim=D, SpatialEmbDim=16,
               locationSize=300)

    root = jax.random.PRNGKey(0)
    k_params, k_x, k_loc, k_usr, k_tim = jax.random.split(root, 5)

    encoder = EncoderPallas(emb, headNum=2, hiddenSize=D, Len=Len, key=k_params)

    # inputs (feature index 4 of x carries the temporal code 0..168)
    x = jax.random.normal(k_x, (B, Len, 6), jnp.float32)
    tim_codes = jax.random.randint(k_tim, (B, Len), 0, 169)
    x = x.at[:, :, 4].set(tim_codes.astype(jnp.float32))
    locOneHot = jax.random.randint(
        k_loc, (B, Len, 1), 0, emb["locationSize"]).astype(jnp.int32)
    usrOneHot = jax.random.normal(k_usr, (B, emb["usrOHDim"]), jnp.float32)

    out = encoder(x, usrOneHot, locOneHot, validLen=Len, maskPer=0.0,
                  device=None, mode="train")
    out = jax.block_until_ready(out)

    ref = encoder.reference(x, usrOneHot, locOneHot)
    assert out.shape == (B, Len, D)
    # tolerance covers f32-matmul pass-ordering differences (MXU kernel vs XLA ref)
    assert jnp.allclose(out, ref, atol=1e-4, rtol=1e-4), "mismatch vs reference"

    print("KERNEL_OK")
</pallas_src>

<mosaic_0001>
module attributes {stable_mosaic.version = 11 : i64} {
  func.func @_fefus_kernel(%arg0: i32, %arg1: memref<256x128xf32, #tpu.memory_space<vmem>>, %arg2: memref<256x128xf32, #tpu.memory_space<vmem>>, %arg3: memref<128x128xf32, #tpu.memory_space<vmem>>, %arg4: memref<1x128xf32, #tpu.memory_space<vmem>>, %arg5: memref<1x128xf32, #tpu.memory_space<vmem>>, %arg6: memref<256x128xf32, #tpu.memory_space<vmem>>) attributes {dimension_semantics = [#tpu.dimension_semantics<parallel>], iteration_bounds = array<i64: 1>, scalar_prefetch = 0 : i64, scratch_operands = 0 : i64, tpu.core_type = #tpu.core_type<tc>, window_params = [{transform_indices = @transform_0, window_bounds = array<i64: 256, 128>}, {transform_indices = @transform_1, window_bounds = array<i64: 256, 128>}, {pipeline_mode = #tpu.pipeline_mode<synchronous>, transform_indices = @transform_2, window_bounds = array<i64: 128, 128>}, {pipeline_mode = #tpu.pipeline_mode<synchronous>, transform_indices = @transform_3, window_bounds = array<i64: 1, 128>}, {pipeline_mode = #tpu.pipeline_mode<synchronous>, transform_indices = @transform_4, window_bounds = array<i64: 1, 128>}, {transform_indices = @transform_5, window_bounds = array<i64: 256, 128>}]} {
    %c0 = arith.constant 0 : index
    %c0_0 = arith.constant 0 : index
    %0 = vector.load %arg1[%c0, %c0_0] : memref<256x128xf32, #tpu.memory_space<vmem>>, vector<256x128xf32>
    %c0_1 = arith.constant 0 : index
    %c0_2 = arith.constant 0 : index
    %1 = vector.load %arg2[%c0_1, %c0_2] : memref<256x128xf32, #tpu.memory_space<vmem>>, vector<256x128xf32>
    %2 = tpu.concatenate %0, %1 in 0 : vector<256x128xf32>, vector<256x128xf32> -> vector<512x128xf32>
    %c0_3 = arith.constant 0 : index
    %c0_4 = arith.constant 0 : index
    %3 = vector.load %arg3[%c0_3, %c0_4] : memref<128x128xf32, #tpu.memory_space<vmem>>, vector<128x128xf32>
    %cst = arith.constant dense<0.000000e+00> : vector<512x128xf32>
    %4 = tpu.matmul %2, %3, %cst {dimension_numbers = #tpu.dot_dimension_numbers<[1], [0], [0], [1], [0, 0, 1, 1], [], []>} : vector<512x128xf32>, vector<128x128xf32>, vector<512x128xf32> -> vector<512x128xf32>
    %c0_5 = arith.constant 0 : index
    %c0_6 = arith.constant 0 : index
    %5 = vector.load %arg4[%c0_5, %c0_6] : memref<1x128xf32, #tpu.memory_space<vmem>>, vector<1x128xf32>
    %6 = vector.broadcast %5 : vector<1x128xf32> to vector<512x128xf32>
    %7 = arith.addf %4, %6 : vector<512x128xf32>
    %cst_7 = arith.constant 0.000000e+00 : f32
    %8 = vector.broadcast %cst_7 : f32 to vector<512x128xf32>
    %9 = arith.maximumf %7, %8 : vector<512x128xf32>
    %c0_8 = arith.constant 0 : index
    %c0_9 = arith.constant 0 : index
    %10 = vector.load %arg5[%c0_8, %c0_9] : memref<1x128xf32, #tpu.memory_space<vmem>>, vector<1x128xf32>
    %11 = vector.broadcast %10 : vector<1x128xf32> to vector<512x128xf32>
    %12 = arith.mulf %9, %11 : vector<512x128xf32>
    %cst_10 = arith.constant dense<0.000000e+00> : vector<512xf32>
    %13 = vector.multi_reduction <add>, %12, %cst_10 [1] : vector<512x128xf32> to vector<512xf32>
    %14 = vector.shape_cast %13 : vector<512xf32> to vector<512x1xf32>
    %15 = vector.extract_strided_slice %14 {offsets = [0, 0], sizes = [256, 1], strides = [1, 1]} : vector<512x1xf32> to vector<256x1xf32>
    %16 = vector.extract_strided_slice %14 {offsets = [256, 0], sizes = [256, 1], strides = [1, 1]} : vector<512x1xf32> to vector<256x1xf32>
    %17 = arith.subf %16, %15 : vector<256x1xf32>
    %18 = math.exp %17 : vector<256x1xf32>
    %cst_11 = arith.constant 1.000000e+00 : f32
    %19 = vector.broadcast %cst_11 : f32 to vector<256x1xf32>
    %20 = arith.addf %19, %18 : vector<256x1xf32>
    %21 = tpu.reciprocal %20 : vector<256x1xf32> -> vector<256x1xf32>
    %cst_12 = arith.constant 1.000000e+00 : f32
    %22 = vector.broadcast %cst_12 : f32 to vector<256x1xf32>
    %23 = arith.subf %22, %21 : vector<256x1xf32>
    %24 = vector.broadcast %21 : vector<256x1xf32> to vector<256x128xf32>
    %25 = arith.mulf %24, %0 : vector<256x128xf32>
    %26 = vector.broadcast %23 : vector<256x1xf32> to vector<256x128xf32>
    %27 = arith.mulf %26, %1 : vector<256x128xf32>
    %28 = arith.addf %25, %27 : vector<256x128xf32>
    %c0_13 = arith.constant 0 : index
    %c0_14 = arith.constant 0 : index
    %29 = vector.load %arg6[%c0_13, %c0_14] : memref<256x128xf32, #tpu.memory_space<vmem>>, vector<256x128xf32>
    tpu.vector_store %arg6[%c0_13, %c0_14], %28 {strides = array<i32>} : memref<256x128xf32, #tpu.memory_space<vmem>>, vector<256x128xf32>,
    return
  }
  func.func @transform_0(%arg0: i32) -> (i32, i32) {
    %c0_i32 = arith.constant 0 : i32
    %c0_i32_0 = arith.constant 0 : i32
    return %arg0, %c0_i32 : i32, i32
  }
  func.func @transform_1(%arg0: i32) -> (i32, i32) {
    %c0_i32 = arith.constant 0 : i32
    %c0_i32_0 = arith.constant 0 : i32
    return %arg0, %c0_i32 : i32, i32
  }
  func.func @transform_2(%arg0: i32) -> (i32, i32) {
    %c0_i32 = arith.constant 0 : i32
    %c0_i32_0 = arith.constant 0 : i32
    %c0_i32_1 = arith.constant 0 : i32
    return %c0_i32, %c0_i32_0 : i32, i32
  }
  func.func @transform_3(%arg0: i32) -> (i32, i32) {
    %c0_i32 = arith.constant 0 : i32
    %c0_i32_0 = arith.constant 0 : i32
    %c0_i32_1 = arith.constant 0 : i32
    return %c0_i32, %c0_i32_0 : i32, i32
  }
  func.func @transform_4(%arg0: i32) -> (i32, i32) {
    %c0_i32 = arith.constant 0 : i32
    %c0_i32_0 = arith.constant 0 : i32
    %c0_i32_1 = arith.constant 0 : i32
    return %c0_i32, %c0_i32_0 : i32, i32
  }
  func.func @transform_5(%arg0: i32) -> (i32, i32) {
    %c0_i32 = arith.constant 0 : i32
    %c0_i32_0 = arith.constant 0 : i32
    return %arg0, %c0_i32 : i32, i32
  }
}

</mosaic_0001>

<llo_original>
// kernel: tpu_custom_call.1
$region0: #{tpu_custom_call.1}
  #allocation0 [shape = 'u32[]', space=smem, size = 0x4, offset = 0x4, fixed_abs, tag = 'smem constant byte address 0x4 - core index']
  #allocation1 [shape = 'u32[144,128]{1,0:T(1,128)}', space=vmem, size = 0x12000, scoped, tag = 'internal scratch']
  %s0 = inlined_call_operand.hbm [shape: f32[256,128], index: 0, kind: input, shape index: {}]
  %s1 = inlined_call_operand.hbm [shape: f32[256,128], index: 1, kind: input, shape index: {}]
  %s2 = inlined_call_operand.hbm [shape: f32[128,128], index: 2, kind: input, shape index: {}]
  %s3 = inlined_call_operand.vmem [shape: f32[1,128], index: 3, kind: input, shape index: {}]
  %s4 = inlined_call_operand.vmem [shape: f32[1,128], index: 4, kind: input, shape index: {}]
  %s5 = inlined_call_operand.hbm [shape: f32[256,128], index: 5, kind: output, shape index: {}]
  %s6 = sld [smem:[#allocation0]]
  $region42: #{tpu_custom_call.1} parent=0
    _
  %s8 = ssub.s32 1, %s6
  %s9 = scalar_select 0, %s8, %s6
  $region1: #{tpu_custom_call.1} parent=0
    #allocation2 [shape = 'u8[131072]{0}', space=vmem, size = 0x20000, scoped, tag = 'input window, operand 0, single buffered']
    #allocation3 [shape = 's32[1]{0}', space=sflag, size = 0x4, scoped, tag = 'scoped memory for tpu_custom_call.1']
    #allocation4 [shape = 's32[1]{0}', space=sflag, size = 0x4, scoped, tag = 'scoped memory for tpu_custom_call.1']
    #allocation5 [shape = 'u8[131072]{0}', space=vmem, size = 0x20000, scoped, tag = 'input window, operand 1, single buffered']
    #allocation6 [shape = 's32[1]{0}', space=sflag, size = 0x4, scoped, tag = 'scoped memory for tpu_custom_call.1']
    #allocation7 [shape = 'u8[65536]{0}', space=vmem, size = 0x10000, scoped, tag = 'input window, operand 2, single buffered']
    #allocation8 [shape = 'u8[131072]{0}', space=vmem, size = 0x20000, scoped, tag = 'output window, operand 0, single buffered']
    %10 = vsyncpa [#allocation3], 0
    %11 = vsyncpa [#allocation6], 0
    %12 = vsyncpa [#allocation4], 0
    // Predicated region
    $region2: #{tpu_custom_call.1} parent=1 // pred_check
      _
    $region3: #{tpu_custom_call.1} parent=1 // pred_check_branch
      %14 = sbr.rel (0) target = $region5
    $region4: #{tpu_custom_call.1} parent=1 // pred_region
      %s16 = ssub.s32 4096, 4096
      %17 = vsyncadd [#allocation3], %s16
      %s18 = sshll.u32 [#allocation2], 4
      %s19 = int_to_ptr.vmem [resolvable:$true] %s18
      %24 = dma.hbm_to_vmem [thread:$0]  %s0, 4096, %s19, [#allocation3], 128, 128, 8
    $region5: #{tpu_custom_call.1} parent=1 // pred_fallthru
      _
    // Predicated region
    $region6: #{tpu_custom_call.1} parent=1 // pred_check
      _
    $region7: #{tpu_custom_call.1} parent=1 // pred_check_branch
      %26 = sbr.rel (0) target = $region9
    $region8: #{tpu_custom_call.1} parent=1 // pred_region
      %s28 = ssub.s32 4096, 4096
      %29 = vsyncadd [#allocation6], %s28
      %s30 = sshll.u32 [#allocation5], 4
      %s31 = int_to_ptr.vmem [resolvable:$true] %s30
      %36 = dma.hbm_to_vmem [thread:$0]  %s1, 4096, %s31, [#allocation6], 128, 128, 8
    $region9: #{tpu_custom_call.1} parent=1 // pred_fallthru
      _
    // Predicated region
    $region10: #{tpu_custom_call.1} parent=1 // pred_check
      _
    $region11: #{tpu_custom_call.1} parent=1 // pred_check_branch
      %38 = sbr.rel (0) target = $region13
    $region12: #{tpu_custom_call.1} parent=1 // pred_region
      %s40 = ssub.s32 2048, 2048
      %41 = vsyncadd [#allocation6], %s40
      %s42 = sshll.u32 [#allocation7], 4
      %s43 = int_to_ptr.vmem [resolvable:$true] %s42
      %48 = dma.hbm_to_vmem [thread:$0]  %s2, 2048, %s43, [#allocation6], 128, 128, 8
    $region13: #{tpu_custom_call.1} parent=1 // pred_fallthru
      _
    // Predicated region
    $region14: #{tpu_custom_call.1} parent=1 // pred_check
      _
    $region15: #{tpu_custom_call.1} parent=1 // pred_check_branch
      %50 = sbr.rel (0) target = $region17
    $region16: #{tpu_custom_call.1} parent=1 // pred_region
      _
    $region17: #{tpu_custom_call.1} parent=1 // pred_fallthru
      _
    // Predicated region
    $region18: #{tpu_custom_call.1} parent=1 // pred_check
      _
    $region19: #{tpu_custom_call.1} parent=1 // pred_check_branch
      %52 = sbr.rel (0) target = $region21
    $region20: #{tpu_custom_call.1} parent=1 // pred_region
      _
    $region21: #{tpu_custom_call.1} parent=1 // pred_fallthru
      _
    // Predicated region
    $region22: #{tpu_custom_call.1} parent=1 // pred_check
      _
    $region23: #{tpu_custom_call.1} parent=1 // pred_check_branch
      %54 = sbr.rel (0) target = $region25
    $region24: #{tpu_custom_call.1} parent=1 // pred_region
      %55 = dma.done [#allocation3], 4096
    $region25: #{tpu_custom_call.1} parent=1 // pred_fallthru
      _
    // Predicated region
    $region26: #{tpu_custom_call.1} parent=1 // pred_check
      _
    $region27: #{tpu_custom_call.1} parent=1 // pred_check_branch
      %57 = sbr.rel (0) target = $region29
    $region28: #{tpu_custom_call.1} parent=1 // pred_region
      %58 = dma.done [#allocation6], 4096
    $region29: #{tpu_custom_call.1} parent=1 // pred_fallthru
      _
    // Predicated region
    $region30: #{tpu_custom_call.1} parent=1 // pred_check
      _
    $region31: #{tpu_custom_call.1} parent=1 // pred_check_branch
      %60 = sbr.rel (0) target = $region33
    $region32: #{tpu_custom_call.1} parent=1 // pred_region
      %61 = dma.done [#allocation6], 2048
    $region33: #{tpu_custom_call.1} parent=1 // pred_fallthru
      _
    %v62 = vld [vmem:[#allocation2] sm:$0xff]
    %v63 = vld [vmem:[#allocation2 + $0x8] sm:$0xff]
    %v64 = vld [vmem:[#allocation2 + $0x10] sm:$0xff]
    %v65 = vld [vmem:[#allocation2 + $0x18] sm:$0xff]
    %v66 = vld [vmem:[#allocation2 + $0x20] sm:$0xff]
    %v67 = vld [vmem:[#allocation2 + $0x28] sm:$0xff]
    %v68 = vld [vmem:[#allocation2 + $0x30] sm:$0xff]
    %v69 = vld [vmem:[#allocation2 + $0x38] sm:$0xff]
    %v70 = vld [vmem:[#allocation2 + $0x40] sm:$0xff]
    %v71 = vld [vmem:[#allocation2 + $0x48] sm:$0xff]
    %v72 = vld [vmem:[#allocation2 + $0x50] sm:$0xff]
    %v73 = vld [vmem:[#allocation2 + $0x58] sm:$0xff]
    %v74 = vld [vmem:[#allocation2 + $0x60] sm:$0xff]
    %v75 = vld [vmem:[#allocation2 + $0x68] sm:$0xff]
    %v76 = vld [vmem:[#allocation2 + $0x70] sm:$0xff]
    %v77 = vld [vmem:[#allocation2 + $0x78] sm:$0xff]
    %v78 = vld [vmem:[#allocation2 + $0x80] sm:$0xff]
    %v79 = vld [vmem:[#allocation2 + $0x88] sm:$0xff]
    %v80 = vld [vmem:[#allocation2 + $0x90] sm:$0xff]
    %v81 = vld [vmem:[#allocation2 + $0x98] sm:$0xff]
    %v82 = vld [vmem:[#allocation2 + $0xa0] sm:$0xff]
    %v83 = vld [vmem:[#allocation2 + $0xa8] sm:$0xff]
    %v84 = vld [vmem:[#allocation2 + $0xb0] sm:$0xff]
    %v85 = vld [vmem:[#allocation2 + $0xb8] sm:$0xff]
    %v86 = vld [vmem:[#allocation2 + $0xc0] sm:$0xff]
    %v87 = vld [vmem:[#allocation2 + $0xc8] sm:$0xff]
    %v88 = vld [vmem:[#allocation2 + $0xd0] sm:$0xff]
    %v89 = vld [vmem:[#allocation2 + $0xd8] sm:$0xff]
    %v90 = vld [vmem:[#allocation2 + $0xe0] sm:$0xff]
    %v91 = vld [vmem:[#allocation2 + $0xe8] sm:$0xff]
    %v92 = vld [vmem:[#allocation2 + $0xf0] sm:$0xff]
    %v93 = vld [vmem:[#allocation2 + $0xf8] sm:$0xff]
    %v94 = vld [vmem:[#allocation5] sm:$0xff]
    %v95 = vld [vmem:[#allocation5 + $0x8] sm:$0xff]
    %v96 = vld [vmem:[#allocation5 + $0x10] sm:$0xff]
    %v97 = vld [vmem:[#allocation5 + $0x18] sm:$0xff]
    %v98 = vld [vmem:[#allocation5 + $0x20] sm:$0xff]
    %v99 = vld [vmem:[#allocation5 + $0x28] sm:$0xff]
    %v100 = vld [vmem:[#allocation5 + $0x30] sm:$0xff]
    %v101 = vld [vmem:[#allocation5 + $0x38] sm:$0xff]
    %v102 = vld [vmem:[#allocation5 + $0x40] sm:$0xff]
    %v103 = vld [vmem:[#allocation5 + $0x48] sm:$0xff]
    %v104 = vld [vmem:[#allocation5 + $0x50] sm:$0xff]
    %v105 = vld [vmem:[#allocation5 + $0x58] sm:$0xff]
    %v106 = vld [vmem:[#allocation5 + $0x60] sm:$0xff]
    %v107 = vld [vmem:[#allocation5 + $0x68] sm:$0xff]
    %v108 = vld [vmem:[#allocation5 + $0x70] sm:$0xff]
    %v109 = vld [vmem:[#allocation5 + $0x78] sm:$0xff]
    %v110 = vld [vmem:[#allocation5 + $0x80] sm:$0xff]
    %v111 = vld [vmem:[#allocation5 + $0x88] sm:$0xff]
    %v112 = vld [vmem:[#allocation5 + $0x90] sm:$0xff]
    %v113 = vld [vmem:[#allocation5 + $0x98] sm:$0xff]
    %v114 = vld [vmem:[#allocation5 + $0xa0] sm:$0xff]
    %v115 = vld [vmem:[#allocation5 + $0xa8] sm:$0xff]
    %v116 = vld [vmem:[#allocation5 + $0xb0] sm:$0xff]
    %v117 = vld [vmem:[#allocation5 + $0xb8] sm:$0xff]
    %v118 = vld [vmem:[#allocation5 + $0xc0] sm:$0xff]
    %v119 = vld [vmem:[#allocation5 + $0xc8] sm:$0xff]
    %v120 = vld [vmem:[#allocation5 + $0xd0] sm:$0xff]
    %v121 = vld [vmem:[#allocation5 + $0xd8] sm:$0xff]
    %v122 = vld [vmem:[#allocation5 + $0xe0] sm:$0xff]
    %v123 = vld [vmem:[#allocation5 + $0xe8] sm:$0xff]
    %v124 = vld [vmem:[#allocation5 + $0xf0] sm:$0xff]
    %v125 = vld [vmem:[#allocation5 + $0xf8] sm:$0xff]
    %v126 = vld [vmem:[#allocation7] sm:$0xff]
    %v127 = vld [vmem:[#allocation7 + $0x8] sm:$0xff]
    %v128 = vld [vmem:[#allocation7 + $0x10] sm:$0xff]
    %v129 = vld [vmem:[#allocation7 + $0x18] sm:$0xff]
    %v130 = vld [vmem:[#allocation7 + $0x20] sm:$0xff]
    %v131 = vld [vmem:[#allocation7 + $0x28] sm:$0xff]
    %v132 = vld [vmem:[#allocation7 + $0x30] sm:$0xff]
    %v133 = vld [vmem:[#allocation7 + $0x38] sm:$0xff]
    %v134 = vld [vmem:[#allocation7 + $0x40] sm:$0xff]
    %v135 = vld [vmem:[#allocation7 + $0x48] sm:$0xff]
    %v136 = vld [vmem:[#allocation7 + $0x50] sm:$0xff]
    %v137 = vld [vmem:[#allocation7 + $0x58] sm:$0xff]
    %v138 = vld [vmem:[#allocation7 + $0x60] sm:$0xff]
    %v139 = vld [vmem:[#allocation7 + $0x68] sm:$0xff]
    %v140 = vld [vmem:[#allocation7 + $0x70] sm:$0xff]
    %v141 = vld [vmem:[#allocation7 + $0x78] sm:$0xff]
    %v142 = vld [vmem:[%s3] sm:$0x1]
    %v144 = vlaneseq
    %v145 = vshrl.u32 %v144, 7
    %v146 = vsub.s32 0, %v145
    %v147 = vrot.slane %v142, %v146
    %149 = vmatprep.subr.mxu0 0.0
    %150 = vmatpush1.msra.mxu0 %v141
    %151 = vmatprep.subr.mxu0 0.0
    %152 = vmatpush1.msra.mxu0 %v140
    %153 = vmatprep.subr.mxu0 0.0
    %154 = vmatpush1.msra.mxu0 %v139
    %155 = vmatprep.subr.mxu0 0.0
    %156 = vmatpush1.msra.mxu0 %v138
    %157 = vmatprep.subr.mxu0 0.0
    %158 = vmatpush1.msra.mxu0 %v137
    %159 = vmatprep.subr.mxu0 0.0
    %160 = vmatpush1.msra.mxu0 %v136
    %161 = vmatprep.subr.mxu0 0.0
    %162 = vmatpush1.msra.mxu0 %v135
    %163 = vmatprep.subr.mxu0 0.0
    %164 = vmatpush1.msra.mxu0 %v134
    %165 = vmatprep.subr.mxu0 0.0
    %166 = vmatpush1.msra.mxu0 %v133
    %167 = vmatprep.subr.mxu0 0.0
    %168 = vmatpush1.msra.mxu0 %v132
    %169 = vmatprep.subr.mxu0 0.0
    %170 = vmatpush1.msra.mxu0 %v131
    %171 = vmatprep.subr.mxu0 0.0
    %172 = vmatpush1.msra.mxu0 %v130
    %173 = vmatprep.subr.mxu0 0.0
    %174 = vmatpush1.msra.mxu0 %v129
    %175 = vmatprep.subr.mxu0 0.0
    %176 = vmatpush1.msra.mxu0 %v128
    %177 = vmatprep.subr.mxu0 0.0
    %178 = vmatpush1.msra.mxu0 %v127
    %179 = vmatprep.subr.mxu0 0.0
    %180 = vmatpush1.msra.mxu0 %v126
    %181 = vmatprep.subr.mxu0 0.0
    %182 = vmatpush2.msra.mxu0 0.0
    %183 = vmatprep.subr.mxu0 0.0
    %184 = vmatpush2.msra.mxu0 0.0
    %185 = vmatprep.subr.mxu0 0.0
    %186 = vmatpush2.msra.mxu0 0.0
    %187 = vmatprep.subr.mxu0 0.0
    %188 = vmatpush2.msra.mxu0 0.0
    %189 = vmatprep.subr.mxu0 0.0
    %190 = vmatpush2.msra.mxu0 0.0
    %191 = vmatprep.subr.mxu0 0.0
    %192 = vmatpush2.msra.mxu0 0.0
    %193 = vmatprep.subr.mxu0 0.0
    %194 = vmatpush2.msra.mxu0 0.0
    %195 = vmatprep.subr.mxu0 0.0
    %196 = vmatpush2.msra.mxu0 0.0
    %197 = vmatprep.subr.mxu0 0.0
    %198 = vmatpush2.msra.mxu0 0.0
    %199 = vmatprep.subr.mxu0 0.0
    %200 = vmatpush2.msra.mxu0 0.0
    %201 = vmatprep.subr.mxu0 0.0
    %202 = vmatpush2.msra.mxu0 0.0
    %203 = vmatprep.subr.mxu0 0.0
    %204 = vmatpush2.msra.mxu0 0.0
    %205 = vmatprep.subr.mxu0 0.0
    %206 = vmatpush2.msra.mxu0 0.0
    %207 = vmatprep.subr.mxu0 0.0
    %208 = vmatpush2.msra.mxu0 0.0
    %209 = vmatprep.subr.mxu0 0.0
    %210 = vmatpush2.msra.mxu0 0.0
    %211 = vmatprep.subr.mxu0 0.0
    %212 = vmatpush2.msra.mxu0 0.0
    %213 = vmatprep.mubr.f32.mxu0 0.0
    %214 = vmatmul.mubr.f32.gmra.mxu0 %v62
    %v215 = vpop.f32.mrf.mxu0
    %v216 = vadd.f32 %v147, %v215
    %v217 = vpop.f32.mrf.mxu0
    %218 = vmatprep.mubr.f32.mxu0 0.0
    %219 = vmatmul.mubr.f32.gmra.mxu0 %v63
    %v220 = vpop.f32.mrf.mxu0
    %v221 = vadd.f32 %v147, %v220
    %v222 = vpop.f32.mrf.mxu0
    %223 = vmatprep.mubr.f32.mxu0 0.0
    %224 = vmatmul.mubr.f32.gmra.mxu0 %v64
    %v225 = vpop.f32.mrf.mxu0
    %v226 = vadd.f32 %v147, %v225
    %v227 = vpop.f32.mrf.mxu0
    %228 = vmatprep.mubr.f32.mxu0 0.0
    %229 = vmatmul.mubr.f32.gmra.mxu0 %v65
    %v230 = vpop.f32.mrf.mxu0
    %v231 = vadd.f32 %v147, %v230
    %v232 = vpop.f32.mrf.mxu0
    %233 = vmatprep.mubr.f32.mxu0 0.0
    %234 = vmatmul.mubr.f32.gmra.mxu0 %v66
    %v235 = vpop.f32.mrf.mxu0
    %v236 = vadd.f32 %v147, %v235
    %v237 = vpop.f32.mrf.mxu0
    %238 = vmatprep.mubr.f32.mxu0 0.0
    %239 = vmatmul.mubr.f32.gmra.mxu0 %v67
    %v240 = vpop.f32.mrf.mxu0
    %v241 = vadd.f32 %v147, %v240
    %v242 = vpop.f32.mrf.mxu0
    %243 = vmatprep.mubr.f32.mxu0 0.0
    %244 = vmatmul.mubr.f32.gmra.mxu0 %v68
    %v245 = vpop.f32.mrf.mxu0
    %v246 = vadd.f32 %v147, %v245
    %v247 = vpop.f32.mrf.mxu0
    %248 = vmatprep.mubr.f32.mxu0 0.0
    %249 = vmatmul.mubr.f32.gmra.mxu0 %v69
    %v250 = vpop.f32.mrf.mxu0
    %v251 = vadd.f32 %v147, %v250
    %v252 = vpop.f32.mrf.mxu0
    %253 = vmatprep.mubr.f32.mxu0 0.0
    %254 = vmatmul.mubr.f32.gmra.mxu0 %v70
    %v255 = vpop.f32.mrf.mxu0
    %v256 = vadd.f32 %v147, %v255
    %v257 = vpop.f32.mrf.mxu0
    %258 = vmatprep.mubr.f32.mxu0 0.0
    %259 = vmatmul.mubr.f32.gmra.mxu0 %v71
    %v260 = vpop.f32.mrf.mxu0
    %v261 = vadd.f32 %v147, %v260
    %v262 = vpop.f32.mrf.mxu0
    %263 = vmatprep.mubr.f32.mxu0 0.0
    %264 = vmatmul.mubr.f32.gmra.mxu0 %v72
    %v265 = vpop.f32.mrf.mxu0
    %v266 = vadd.f32 %v147, %v265
    %v267 = vpop.f32.mrf.mxu0
    %268 = vmatprep.mubr.f32.mxu0 0.0
    %269 = vmatmul.mubr.f32.gmra.mxu0 %v73
    %v270 = vpop.f32.mrf.mxu0
    %v271 = vadd.f32 %v147, %v270
    %v272 = vpop.f32.mrf.mxu0
    %273 = vmatprep.mubr.f32.mxu0 0.0
    %274 = vmatmul.mubr.f32.gmra.mxu0 %v74
    %v275 = vpop.f32.mrf.mxu0
    %v276 = vadd.f32 %v147, %v275
    %v277 = vpop.f32.mrf.mxu0
    %278 = vmatprep.mubr.f32.mxu0 0.0
    %279 = vmatmul.mubr.f32.gmra.mxu0 %v75
    %v280 = vpop.f32.mrf.mxu0
    %v281 = vadd.f32 %v147, %v280
    %v282 = vpop.f32.mrf.mxu0
    %283 = vmatprep.mubr.f32.mxu0 0.0
    %284 = vmatmul.mubr.f32.gmra.mxu0 %v76
    %v285 = vpop.f32.mrf.mxu0
    %v286 = vadd.f32 %v147, %v285
    %v287 = vpop.f32.mrf.mxu0
    %288 = vmatprep.mubr.f32.mxu0 0.0
    %289 = vmatmul.mubr.f32.gmra.mxu0 %v77
    %v290 = vpop.f32.mrf.mxu0
    %v291 = vadd.f32 %v147, %v290
    %v292 = vpop.f32.mrf.mxu0
    %293 = vmatprep.mubr.f32.mxu0 0.0
    %294 = vmatmul.mubr.f32.gmra.mxu0 %v78
    %v295 = vpop.f32.mrf.mxu0
    %v296 = vadd.f32 %v147, %v295
    %v297 = vpop.f32.mrf.mxu0
    %298 = vmatprep.mubr.f32.mxu0 0.0
    %299 = vmatmul.mubr.f32.gmra.mxu0 %v79
    %v300 = vpop.f32.mrf.mxu0
    %v301 = vadd.f32 %v147, %v300
    %v302 = vpop.f32.mrf.mxu0
    %303 = vmatprep.mubr.f32.mxu0 0.0
    %304 = vmatmul.mubr.f32.gmra.mxu0 %v80
    %v305 = vpop.f32.mrf.mxu0
    %v306 = vadd.f32 %v147, %v305
    %v307 = vpop.f32.mrf.mxu0
    %308 = vmatprep.mubr.f32.mxu0 0.0
    %309 = vmatmul.mubr.f32.gmra.mxu0 %v81
    %v310 = vpop.f32.mrf.mxu0
    %v311 = vadd.f32 %v147, %v310
    %v312 = vpop.f32.mrf.mxu0
    %313 = vmatprep.mubr.f32.mxu0 0.0
    %314 = vmatmul.mubr.f32.gmra.mxu0 %v82
    %v315 = vpop.f32.mrf.mxu0
    %v316 = vadd.f32 %v147, %v315
    %v317 = vpop.f32.mrf.mxu0
    %318 = vmatprep.mubr.f32.mxu0 0.0
    %319 = vmatmul.mubr.f32.gmra.mxu0 %v83
    %v320 = vpop.f32.mrf.mxu0
    %v321 = vadd.f32 %v147, %v320
    %v322 = vpop.f32.mrf.mxu0
    %323 = vmatprep.mubr.f32.mxu0 0.0
    %324 = vmatmul.mubr.f32.gmra.mxu0 %v84
    %v325 = vpop.f32.mrf.mxu0
    %v326 = vadd.f32 %v147, %v325
    %v327 = vpop.f32.mrf.mxu0
    %328 = vmatprep.mubr.f32.mxu0 0.0
    %329 = vmatmul.mubr.f32.gmra.mxu0 %v85
    %v330 = vpop.f32.mrf.mxu0
    %v331 = vadd.f32 %v147, %v330
    %v332 = vpop.f32.mrf.mxu0
    %333 = vmatprep.mubr.f32.mxu0 0.0
    %334 = vmatmul.mubr.f32.gmra.mxu0 %v86
    %v335 = vpop.f32.mrf.mxu0
    %v336 = vadd.f32 %v147, %v335
    %v337 = vpop.f32.mrf.mxu0
    %338 = vmatprep.mubr.f32.mxu0 0.0
    %339 = vmatmul.mubr.f32.gmra.mxu0 %v87
    %v340 = vpop.f32.mrf.mxu0
    %v341 = vadd.f32 %v147, %v340
    %v342 = vpop.f32.mrf.mxu0
    %343 = vmatprep.mubr.f32.mxu0 0.0
    %344 = vmatmul.mubr.f32.gmra.mxu0 %v88
    %v345 = vpop.f32.mrf.mxu0
    %v346 = vadd.f32 %v147, %v345
    %v347 = vpop.f32.mrf.mxu0
    %348 = vmatprep.mubr.f32.mxu0 0.0
    %349 = vmatmul.mubr.f32.gmra.mxu0 %v89
    %v350 = vpop.f32.mrf.mxu0
    %v351 = vadd.f32 %v147, %v350
    %v352 = vpop.f32.mrf.mxu0
    %353 = vmatprep.mubr.f32.mxu0 0.0
    %354 = vmatmul.mubr.f32.gmra.mxu0 %v90
    %v355 = vpop.f32.mrf.mxu0
    %v356 = vadd.f32 %v147, %v355
    %v357 = vpop.f32.mrf.mxu0
    %358 = vmatprep.mubr.f32.mxu0 0.0
    %359 = vmatmul.mubr.f32.gmra.mxu0 %v91
    %v360 = vpop.f32.mrf.mxu0
    %v361 = vadd.f32 %v147, %v360
    %v362 = vpop.f32.mrf.mxu0
    %363 = vmatprep.mubr.f32.mxu0 0.0
    %364 = vmatmul.mubr.f32.gmra.mxu0 %v92
    %v365 = vpop.f32.mrf.mxu0
    %v366 = vadd.f32 %v147, %v365
    %v367 = vpop.f32.mrf.mxu0
    %368 = vmatprep.mubr.f32.mxu0 0.0
    %369 = vmatmul.mubr.f32.gmra.mxu0 %v93
    %v370 = vpop.f32.mrf.mxu0
    %v371 = vadd.f32 %v147, %v370
    %v372 = vpop.f32.mrf.mxu0
    %373 = vmatprep.mubr.f32.mxu0 0.0
    %374 = vmatmul.mubr.f32.gmra.mxu0 %v94
    %v375 = vpop.f32.mrf.mxu0
    %v376 = vadd.f32 %v147, %v375
    %v377 = vpop.f32.mrf.mxu0
    %378 = vmatprep.mubr.f32.mxu0 0.0
    %379 = vmatmul.mubr.f32.gmra.mxu0 %v95
    %v380 = vpop.f32.mrf.mxu0
    %v381 = vadd.f32 %v147, %v380
    %v382 = vpop.f32.mrf.mxu0
    %383 = vmatprep.mubr.f32.mxu0 0.0
    %384 = vmatmul.mubr.f32.gmra.mxu0 %v96
    %v385 = vpop.f32.mrf.mxu0
    %v386 = vadd.f32 %v147, %v385
    %v387 = vpop.f32.mrf.mxu0
    %388 = vmatprep.mubr.f32.mxu0 0.0
    %389 = vmatmul.mubr.f32.gmra.mxu0 %v97
    %v390 = vpop.f32.mrf.mxu0
    %v391 = vadd.f32 %v147, %v390
    %v392 = vpop.f32.mrf.mxu0
    %393 = vmatprep.mubr.f32.mxu0 0.0
    %394 = vmatmul.mubr.f32.gmra.mxu0 %v98
    %v395 = vpop.f32.mrf.mxu0
    %v396 = vadd.f32 %v147, %v395
    %v397 = vpop.f32.mrf.mxu0
    %398 = vmatprep.mubr.f32.mxu0 0.0
    %399 = vmatmul.mubr.f32.gmra.mxu0 %v99
    %v400 = vpop.f32.mrf.mxu0
    %v401 = vadd.f32 %v147, %v400
    %v402 = vpop.f32.mrf.mxu0
    %403 = vmatprep.mubr.f32.mxu0 0.0
    %404 = vmatmul.mubr.f32.gmra.mxu0 %v100
    %v405 = vpop.f32.mrf.mxu0
    %v406 = vadd.f32 %v147, %v405
    %v407 = vpop.f32.mrf.mxu0
    %408 = vmatprep.mubr.f32.mxu0 0.0
    %409 = vmatmul.mubr.f32.gmra.mxu0 %v101
    %v410 = vpop.f32.mrf.mxu0
    %v411 = vadd.f32 %v147, %v410
    %v412 = vpop.f32.mrf.mxu0
    %413 = vmatprep.mubr.f32.mxu0 0.0
    %414 = vmatmul.mubr.f32.gmra.mxu0 %v102
    %v415 = vpop.f32.mrf.mxu0
    %v416 = vadd.f32 %v147, %v415
    %v417 = vpop.f32.mrf.mxu0
    %418 = vmatprep.mubr.f32.mxu0 0.0
    %419 = vmatmul.mubr.f32.gmra.mxu0 %v103
    %v420 = vpop.f32.mrf.mxu0
    %v421 = vadd.f32 %v147, %v420
    %v422 = vpop.f32.mrf.mxu0
    %423 = vmatprep.mubr.f32.mxu0 0.0
    %424 = vmatmul.mubr.f32.gmra.mxu0 %v104
    %v425 = vpop.f32.mrf.mxu0
    %v426 = vadd.f32 %v147, %v425
    %v427 = vpop.f32.mrf.mxu0
    %428 = vmatprep.mubr.f32.mxu0 0.0
    %429 = vmatmul.mubr.f32.gmra.mxu0 %v105
    %v430 = vpop.f32.mrf.mxu0
    %v431 = vadd.f32 %v147, %v430
    %v432 = vpop.f32.mrf.mxu0
    %433 = vmatprep.mubr.f32.mxu0 0.0
    %434 = vmatmul.mubr.f32.gmra.mxu0 %v106
    %v435 = vpop.f32.mrf.mxu0
    %v436 = vadd.f32 %v147, %v435
    %v437 = vpop.f32.mrf.mxu0
    %438 = vmatprep.mubr.f32.mxu0 0.0
    %439 = vmatmul.mubr.f32.gmra.mxu0 %v107
    %v440 = vpop.f32.mrf.mxu0
    %v441 = vadd.f32 %v147, %v440
    %v442 = vpop.f32.mrf.mxu0
    %443 = vmatprep.mubr.f32.mxu0 0.0
    %444 = vmatmul.mubr.f32.gmra.mxu0 %v108
    %v445 = vpop.f32.mrf.mxu0
    %v446 = vadd.f32 %v147, %v445
    %v447 = vpop.f32.mrf.mxu0
    %448 = vmatprep.mubr.f32.mxu0 0.0
    %449 = vmatmul.mubr.f32.gmra.mxu0 %v109
    %v450 = vpop.f32.mrf.mxu0
    %v451 = vadd.f32 %v147, %v450
    %v452 = vpop.f32.mrf.mxu0
    %453 = vmatprep.mubr.f32.mxu0 0.0
    %454 = vmatmul.mubr.f32.gmra.mxu0 %v110
    %v455 = vpop.f32.mrf.mxu0
    %v456 = vadd.f32 %v147, %v455
    %v457 = vpop.f32.mrf.mxu0
    %458 = vmatprep.mubr.f32.mxu0 0.0
    %459 = vmatmul.mubr.f32.gmra.mxu0 %v111
    %v460 = vpop.f32.mrf.mxu0
    %v461 = vadd.f32 %v147, %v460
    %v462 = vpop.f32.mrf.mxu0
    %463 = vmatprep.mubr.f32.mxu0 0.0
    %464 = vmatmul.mubr.f32.gmra.mxu0 %v112
    %v465 = vpop.f32.mrf.mxu0
    %v466 = vadd.f32 %v147, %v465
    %v467 = vpop.f32.mrf.mxu0
    %468 = vmatprep.mubr.f32.mxu0 0.0
    %469 = vmatmul.mubr.f32.gmra.mxu0 %v113
    %v470 = vpop.f32.mrf.mxu0
    %v471 = vadd.f32 %v147, %v470
    %v472 = vpop.f32.mrf.mxu0
    %473 = vmatprep.mubr.f32.mxu0 0.0
    %474 = vmatmul.mubr.f32.gmra.mxu0 %v114
    %v475 = vpop.f32.mrf.mxu0
    %v476 = vadd.f32 %v147, %v475
    %v477 = vpop.f32.mrf.mxu0
    %478 = vmatprep.mubr.f32.mxu0 0.0
    %479 = vmatmul.mubr.f32.gmra.mxu0 %v115
    %v480 = vpop.f32.mrf.mxu0
    %v481 = vadd.f32 %v147, %v480
    %v482 = vpop.f32.mrf.mxu0
    %483 = vmatprep.mubr.f32.mxu0 0.0
    %484 = vmatmul.mubr.f32.gmra.mxu0 %v116
    %v485 = vpop.f32.mrf.mxu0
    %v486 = vadd.f32 %v147, %v485
    %v487 = vpop.f32.mrf.mxu0
    %488 = vmatprep.mubr.f32.mxu0 0.0
    %489 = vmatmul.mubr.f32.gmra.mxu0 %v117
    %v490 = vpop.f32.mrf.mxu0
    %v491 = vadd.f32 %v147, %v490
    %v492 = vpop.f32.mrf.mxu0
    %493 = vmatprep.mubr.f32.mxu0 0.0
    %494 = vmatmul.mubr.f32.gmra.mxu0 %v118
    %v495 = vpop.f32.mrf.mxu0
    %v496 = vadd.f32 %v147, %v495
    %v497 = vpop.f32.mrf.mxu0
    %498 = vmatprep.mubr.f32.mxu0 0.0
    %499 = vmatmul.mubr.f32.gmra.mxu0 %v119
    %v500 = vpop.f32.mrf.mxu0
    %v501 = vadd.f32 %v147, %v500
    %v502 = vpop.f32.mrf.mxu0
    %503 = vmatprep.mubr.f32.mxu0 0.0
    %504 = vmatmul.mubr.f32.gmra.mxu0 %v120
    %v505 = vpop.f32.mrf.mxu0
    %v506 = vadd.f32 %v147, %v505
    %v507 = vpop.f32.mrf.mxu0
    %508 = vmatprep.mubr.f32.mxu0 0.0
    %509 = vmatmul.mubr.f32.gmra.mxu0 %v121
    %v510 = vpop.f32.mrf.mxu0
    %v511 = vadd.f32 %v147, %v510
    %v512 = vpop.f32.mrf.mxu0
    %513 = vmatprep.mubr.f32.mxu0 0.0
    %514 = vmatmul.mubr.f32.gmra.mxu0 %v122
    %v515 = vpop.f32.mrf.mxu0
    %v516 = vadd.f32 %v147, %v515
    %v517 = vpop.f32.mrf.mxu0
    %518 = vmatprep.mubr.f32.mxu0 0.0
    %519 = vmatmul.mubr.f32.gmra.mxu0 %v123
    %v520 = vpop.f32.mrf.mxu0
    %v521 = vadd.f32 %v147, %v520
    %v522 = vpop.f32.mrf.mxu0
    %523 = vmatprep.mubr.f32.mxu0 0.0
    %524 = vmatmul.mubr.f32.gmra.mxu0 %v124
    %v525 = vpop.f32.mrf.mxu0
    %v526 = vadd.f32 %v147, %v525
    %v527 = vpop.f32.mrf.mxu0
    %528 = vmatprep.mubr.f32.mxu0 0.0
    %529 = vmatmul.mubr.f32.gmra.mxu0 %v125
    %v530 = vpop.f32.mrf.mxu0
    %v531 = vadd.f32 %v147, %v530
    %v532 = vpop.f32.mrf.mxu0
    %533 = vdwg.mxu0
    %v534 = vmax.f32 %v216, 0.0
    %v535 = vmax.f32 %v221, 0.0
    %v536 = vmax.f32 %v226, 0.0
    %v537 = vmax.f32 %v231, 0.0
    %v538 = vmax.f32 %v236, 0.0
    %v539 = vmax.f32 %v241, 0.0
    %v540 = vmax.f32 %v246, 0.0
    %v541 = vmax.f32 %v251, 0.0
    %v542 = vmax.f32 %v256, 0.0
    %v543 = vmax.f32 %v261, 0.0
    %v544 = vmax.f32 %v266, 0.0
    %v545 = vmax.f32 %v271, 0.0
    %v546 = vmax.f32 %v276, 0.0
    %v547 = vmax.f32 %v281, 0.0
    %v548 = vmax.f32 %v286, 0.0
    %v549 = vmax.f32 %v291, 0.0
    %v550 = vmax.f32 %v296, 0.0
    %v551 = vmax.f32 %v301, 0.0
    %v552 = vmax.f32 %v306, 0.0
    %v553 = vmax.f32 %v311, 0.0
    %v554 = vmax.f32 %v316, 0.0
    %v555 = vmax.f32 %v321, 0.0
    %v556 = vmax.f32 %v326, 0.0
    %v557 = vmax.f32 %v331, 0.0
    %v558 = vmax.f32 %v336, 0.0
    %v559 = vmax.f32 %v341, 0.0
    %v560 = vmax.f32 %v346, 0.0
    %v561 = vmax.f32 %v351, 0.0
    %v562 = vmax.f32 %v356, 0.0
    %v563 = vmax.f32 %v361, 0.0
    %v564 = vmax.f32 %v366, 0.0
    %v565 = vmax.f32 %v371, 0.0
    %v566 = vmax.f32 %v376, 0.0
    %v567 = vmax.f32 %v381, 0.0
    %v568 = vmax.f32 %v386, 0.0
    %v569 = vmax.f32 %v391, 0.0
    %v570 = vmax.f32 %v396, 0.0
    %v571 = vmax.f32 %v401, 0.0
    %v572 = vmax.f32 %v406, 0.0
    %v573 = vmax.f32 %v411, 0.0
    %v574 = vmax.f32 %v416, 0.0
    %v575 = vmax.f32 %v421, 0.0
    %v576 = vmax.f32 %v426, 0.0
    %v577 = vmax.f32 %v431, 0.0
    %v578 = vmax.f32 %v436, 0.0
    %v579 = vmax.f32 %v441, 0.0
    %v580 = vmax.f32 %v446, 0.0
    %v581 = vmax.f32 %v451, 0.0
    %v582 = vmax.f32 %v456, 0.0
    %v583 = vmax.f32 %v461, 0.0
    %v584 = vmax.f32 %v466, 0.0
    %v585 = vmax.f32 %v471, 0.0
    %v586 = vmax.f32 %v476, 0.0
    %v587 = vmax.f32 %v481, 0.0
    %v588 = vmax.f32 %v486, 0.0
    %v589 = vmax.f32 %v491, 0.0
    %v590 = vmax.f32 %v496, 0.0
    %v591 = vmax.f32 %v501, 0.0
    %v592 = vmax.f32 %v506, 0.0
    %v593 = vmax.f32 %v511, 0.0
    %v594 = vmax.f32 %v516, 0.0
    %v595 = vmax.f32 %v521, 0.0
    %v596 = vmax.f32 %v526, 0.0
    %v597 = vmax.f32 %v531, 0.0
    %v598 = vld [vmem:[%s4] sm:$0x1]
    %v600 = vlaneseq
    %v601 = vshrl.u32 %v600, 7
    %v602 = vsub.s32 0, %v601
    %v603 = vrot.slane %v598, %v602
    %v605 = vmul.f32 %v534, %v603
    %v606 = vmul.f32 %v535, %v603
    %v607 = vmul.f32 %v536, %v603
    %v608 = vmul.f32 %v537, %v603
    %v609 = vmul.f32 %v538, %v603
    %v610 = vmul.f32 %v539, %v603
    %v611 = vmul.f32 %v540, %v603
    %v612 = vmul.f32 %v541, %v603
    %v613 = vmul.f32 %v542, %v603
    %v614 = vmul.f32 %v543, %v603
    %v615 = vmul.f32 %v544, %v603
    %v616 = vmul.f32 %v545, %v603
    %v617 = vmul.f32 %v546, %v603
    %v618 = vmul.f32 %v547, %v603
    %v619 = vmul.f32 %v548, %v603
    %v620 = vmul.f32 %v549, %v603
    %v621 = vmul.f32 %v550, %v603
    %v622 = vmul.f32 %v551, %v603
    %v623 = vmul.f32 %v552, %v603
    %v624 = vmul.f32 %v553, %v603
    %v625 = vmul.f32 %v554, %v603
    %v626 = vmul.f32 %v555, %v603
    %v627 = vmul.f32 %v556, %v603
    %v628 = vmul.f32 %v557, %v603
    %v629 = vmul.f32 %v558, %v603
    %v630 = vmul.f32 %v559, %v603
    %v631 = vmul.f32 %v560, %v603
    %v632 = vmul.f32 %v561, %v603
    %v633 = vmul.f32 %v562, %v603
    %v634 = vmul.f32 %v563, %v603
    %v635 = vmul.f32 %v564, %v603
    %v636 = vmul.f32 %v565, %v603
    %v637 = vmul.f32 %v566, %v603
    %v638 = vmul.f32 %v567, %v603
    %v639 = vmul.f32 %v568, %v603
    %v640 = vmul.f32 %v569, %v603
    %v641 = vmul.f32 %v570, %v603
    %v642 = vmul.f32 %v571, %v603
    %v643 = vmul.f32 %v572, %v603
    %v644 = vmul.f32 %v573, %v603
    %v645 = vmul.f32 %v574, %v603
    %v646 = vmul.f32 %v575, %v603
    %v647 = vmul.f32 %v576, %v603
    %v648 = vmul.f32 %v577, %v603
    %v649 = vmul.f32 %v578, %v603
    %v650 = vmul.f32 %v579, %v603
    %v651 = vmul.f32 %v580, %v603
    %v652 = vmul.f32 %v581, %v603
    %v653 = vmul.f32 %v582, %v603
    %v654 = vmul.f32 %v583, %v603
    %v655 = vmul.f32 %v584, %v603
    %v656 = vmul.f32 %v585, %v603
    %v657 = vmul.f32 %v586, %v603
    %v658 = vmul.f32 %v587, %v603
    %v659 = vmul.f32 %v588, %v603
    %v660 = vmul.f32 %v589, %v603
    %v661 = vmul.f32 %v590, %v603
    %v662 = vmul.f32 %v591, %v603
    %v663 = vmul.f32 %v592, %v603
    %v664 = vmul.f32 %v593, %v603
    %v665 = vmul.f32 %v594, %v603
    %v666 = vmul.f32 %v595, %v603
    %v667 = vmul.f32 %v596, %v603
    %v668 = vmul.f32 %v597, %v603
    %669 = vadd.xlane.f32.xlu0 %v605
    %v670 = vpop.xlane.xlu0 %669
    %671 = vadd.xlane.f32.xlu0 %v606
    %v672 = vpop.xlane.xlu0 %671
    %673 = vadd.xlane.f32.xlu0 %v607
    %v674 = vpop.xlane.xlu0 %673
    %675 = vadd.xlane.f32.xlu0 %v608
    %v676 = vpop.xlane.xlu0 %675
    %677 = vadd.xlane.f32.xlu0 %v609
    %v678 = vpop.xlane.xlu0 %677
    %679 = vadd.xlane.f32.xlu0 %v610
    %v680 = vpop.xlane.xlu0 %679
    %681 = vadd.xlane.f32.xlu0 %v611
    %v682 = vpop.xlane.xlu0 %681
    %683 = vadd.xlane.f32.xlu0 %v612
    %v684 = vpop.xlane.xlu0 %683
    %685 = vadd.xlane.f32.xlu0 %v613
    %v686 = vpop.xlane.xlu0 %685
    %687 = vadd.xlane.f32.xlu0 %v614
    %v688 = vpop.xlane.xlu0 %687
    %689 = vadd.xlane.f32.xlu0 %v615
    %v690 = vpop.xlane.xlu0 %689
    %691 = vadd.xlane.f32.xlu0 %v616
    %v692 = vpop.xlane.xlu0 %691
    %693 = vadd.xlane.f32.xlu0 %v617
    %v694 = vpop.xlane.xlu0 %693
    %695 = vadd.xlane.f32.xlu0 %v618
    %v696 = vpop.xlane.xlu0 %695
    %697 = vadd.xlane.f32.xlu0 %v619
    %v698 = vpop.xlane.xlu0 %697
    %699 = vadd.xlane.f32.xlu0 %v620
    %v700 = vpop.xlane.xlu0 %699
    %701 = vadd.xlane.f32.xlu0 %v621
    %v702 = vpop.xlane.xlu0 %701
    %703 = vadd.xlane.f32.xlu0 %v622
    %v704 = vpop.xlane.xlu0 %703
    %705 = vadd.xlane.f32.xlu0 %v623
    %v706 = vpop.xlane.xlu0 %705
    %707 = vadd.xlane.f32.xlu0 %v624
    %v708 = vpop.xlane.xlu0 %707
    %709 = vadd.xlane.f32.xlu0 %v625
    %v710 = vpop.xlane.xlu0 %709
    %711 = vadd.xlane.f32.xlu0 %v626
    %v712 = vpop.xlane.xlu0 %711
    %713 = vadd.xlane.f32.xlu0 %v627
    %v714 = vpop.xlane.xlu0 %713
    %715 = vadd.xlane.f32.xlu0 %v628
    %v716 = vpop.xlane.xlu0 %715
    %717 = vadd.xlane.f32.xlu0 %v629
    %v718 = vpop.xlane.xlu0 %717
    %719 = vadd.xlane.f32.xlu0 %v630
    %v720 = vpop.xlane.xlu0 %719
    %721 = vadd.xlane.f32.xlu0 %v631
    %v722 = vpop.xlane.xlu0 %721
    %723 = vadd.xlane.f32.xlu0 %v632
    %v724 = vpop.xlane.xlu0 %723
    %725 = vadd.xlane.f32.xlu0 %v633
    %v726 = vpop.xlane.xlu0 %725
    %727 = vadd.xlane.f32.xlu0 %v634
    %v728 = vpop.xlane.xlu0 %727
    %729 = vadd.xlane.f32.xlu0 %v635
    %v730 = vpop.xlane.xlu0 %729
    %731 = vadd.xlane.f32.xlu0 %v636
    %v732 = vpop.xlane.xlu0 %731
    %733 = vadd.xlane.f32.xlu0 %v637
    %v734 = vpop.xlane.xlu0 %733
    %735 = vadd.xlane.f32.xlu0 %v638
    %v736 = vpop.xlane.xlu0 %735
    %737 = vadd.xlane.f32.xlu0 %v639
    %v738 = vpop.xlane.xlu0 %737
    %739 = vadd.xlane.f32.xlu0 %v640
    %v740 = vpop.xlane.xlu0 %739
    %741 = vadd.xlane.f32.xlu0 %v641
    %v742 = vpop.xlane.xlu0 %741
    %743 = vadd.xlane.f32.xlu0 %v642
    %v744 = vpop.xlane.xlu0 %743
    %745 = vadd.xlane.f32.xlu0 %v643
    %v746 = vpop.xlane.xlu0 %745
    %747 = vadd.xlane.f32.xlu0 %v644
    %v748 = vpop.xlane.xlu0 %747
    %749 = vadd.xlane.f32.xlu0 %v645
    %v750 = vpop.xlane.xlu0 %749
    %751 = vadd.xlane.f32.xlu0 %v646
    %v752 = vpop.xlane.xlu0 %751
    %753 = vadd.xlane.f32.xlu0 %v647
    %v754 = vpop.xlane.xlu0 %753
    %755 = vadd.xlane.f32.xlu0 %v648
    %v756 = vpop.xlane.xlu0 %755
    %757 = vadd.xlane.f32.xlu0 %v649
    %v758 = vpop.xlane.xlu0 %757
    %759 = vadd.xlane.f32.xlu0 %v650
    %v760 = vpop.xlane.xlu0 %759
    %761 = vadd.xlane.f32.xlu0 %v651
    %v762 = vpop.xlane.xlu0 %761
    %763 = vadd.xlane.f32.xlu0 %v652
    %v764 = vpop.xlane.xlu0 %763
    %765 = vadd.xlane.f32.xlu0 %v653
    %v766 = vpop.xlane.xlu0 %765
    %767 = vadd.xlane.f32.xlu0 %v654
    %v768 = vpop.xlane.xlu0 %767
    %769 = vadd.xlane.f32.xlu0 %v655
    %v770 = vpop.xlane.xlu0 %769
    %771 = vadd.xlane.f32.xlu0 %v656
    %v772 = vpop.xlane.xlu0 %771
    %773 = vadd.xlane.f32.xlu0 %v657
    %v774 = vpop.xlane.xlu0 %773
    %775 = vadd.xlane.f32.xlu0 %v658
    %v776 = vpop.xlane.xlu0 %775
    %777 = vadd.xlane.f32.xlu0 %v659
    %v778 = vpop.xlane.xlu0 %777
    %779 = vadd.xlane.f32.xlu0 %v660
    %v780 = vpop.xlane.xlu0 %779
    %781 = vadd.xlane.f32.xlu0 %v661
    %v782 = vpop.xlane.xlu0 %781
    %783 = vadd.xlane.f32.xlu0 %v662
    %v784 = vpop.xlane.xlu0 %783
    %785 = vadd.xlane.f32.xlu0 %v663
    %v786 = vpop.xlane.xlu0 %785
    %787 = vadd.xlane.f32.xlu0 %v664
    %v788 = vpop.xlane.xlu0 %787
    %789 = vadd.xlane.f32.xlu0 %v665
    %v790 = vpop.xlane.xlu0 %789
    %791 = vadd.xlane.f32.xlu0 %v666
    %v792 = vpop.xlane.xlu0 %791
    %793 = vadd.xlane.f32.xlu0 %v667
    %v794 = vpop.xlane.xlu0 %793
    %795 = vadd.xlane.f32.xlu0 %v668
    %v796 = vpop.xlane.xlu0 %795
    %v797 = vsub.f32 %v734, %v670
    %v798 = vsub.f32 %v736, %v672
    %v799 = vsub.f32 %v738, %v674
    %v800 = vsub.f32 %v740, %v676
    %v801 = vsub.f32 %v742, %v678
    %v802 = vsub.f32 %v744, %v680
    %v803 = vsub.f32 %v746, %v682
    %v804 = vsub.f32 %v748, %v684
    %v805 = vsub.f32 %v750, %v686
    %v806 = vsub.f32 %v752, %v688
    %v807 = vsub.f32 %v754, %v690
    %v808 = vsub.f32 %v756, %v692
    %v809 = vsub.f32 %v758, %v694
    %v810 = vsub.f32 %v760, %v696
    %v811 = vsub.f32 %v762, %v698
    %v812 = vsub.f32 %v764, %v700
    %v813 = vsub.f32 %v766, %v702
    %v814 = vsub.f32 %v768, %v704
    %v815 = vsub.f32 %v770, %v706
    %v816 = vsub.f32 %v772, %v708
    %v817 = vsub.f32 %v774, %v710
    %v818 = vsub.f32 %v776, %v712
    %v819 = vsub.f32 %v778, %v714
    %v820 = vsub.f32 %v780, %v716
    %v821 = vsub.f32 %v782, %v718
    %v822 = vsub.f32 %v784, %v720
    %v823 = vsub.f32 %v786, %v722
    %v824 = vsub.f32 %v788, %v724
    %v825 = vsub.f32 %v790, %v726
    %v826 = vsub.f32 %v792, %v728
    %v827 = vsub.f32 %v794, %v730
    %v828 = vsub.f32 %v796, %v732
    %v829 = vmul.f32 %v797, 1.442695
    %v830 = vpow.pop %v829
    %v831 = vmul.f32 %v798, 1.442695
    %v832 = vpow.pop %v831
    %v833 = vmul.f32 %v799, 1.442695
    %v834 = vpow.pop %v833
    %v835 = vmul.f32 %v800, 1.442695
    %v836 = vpow.pop %v835
    %v837 = vmul.f32 %v801, 1.442695
    %v838 = vpow.pop %v837
    %v839 = vmul.f32 %v802, 1.442695
    %v840 = vpow.pop %v839
    %v841 = vmul.f32 %v803, 1.442695
    %v842 = vpow.pop %v841
    %v843 = vmul.f32 %v804, 1.442695
    %v844 = vpow.pop %v843
    %v845 = vmul.f32 %v805, 1.442695
    %v846 = vpow.pop %v845
    %v847 = vmul.f32 %v806, 1.442695
    %v848 = vpow.pop %v847
    %v849 = vmul.f32 %v807, 1.442695
    %v850 = vpow.pop %v849
    %v851 = vmul.f32 %v808, 1.442695
    %v852 = vpow.pop %v851
    %v853 = vmul.f32 %v809, 1.442695
    %v854 = vpow.pop %v853
    %v855 = vmul.f32 %v810, 1.442695
    %v856 = vpow.pop %v855
    %v857 = vmul.f32 %v811, 1.442695
    %v858 = vpow.pop %v857
    %v859 = vmul.f32 %v812, 1.442695
    %v860 = vpow.pop %v859
    %v861 = vmul.f32 %v813, 1.442695
    %v862 = vpow.pop %v861
    %v863 = vmul.f32 %v814, 1.442695
    %v864 = vpow.pop %v863
    %v865 = vmul.f32 %v815, 1.442695
    %v866 = vpow.pop %v865
    %v867 = vmul.f32 %v816, 1.442695
    %v868 = vpow.pop %v867
    %v869 = vmul.f32 %v817, 1.442695
    %v870 = vpow.pop %v869
    %v871 = vmul.f32 %v818, 1.442695
    %v872 = vpow.pop %v871
    %v873 = vmul.f32 %v819, 1.442695
    %v874 = vpow.pop %v873
    %v875 = vmul.f32 %v820, 1.442695
    %v876 = vpow.pop %v875
    %v877 = vmul.f32 %v821, 1.442695
    %v878 = vpow.pop %v877
    %v879 = vmul.f32 %v822, 1.442695
    %v880 = vpow.pop %v879
    %v881 = vmul.f32 %v823, 1.442695
    %v882 = vpow.pop %v881
    %v883 = vmul.f32 %v824, 1.442695
    %v884 = vpow.pop %v883
    %v885 = vmul.f32 %v825, 1.442695
    %v886 = vpow.pop %v885
    %v887 = vmul.f32 %v826, 1.442695
    %v888 = vpow.pop %v887
    %v889 = vmul.f32 %v827, 1.442695
    %v890 = vpow.pop %v889
    %v891 = vmul.f32 %v828, 1.442695
    %v892 = vpow.pop %v891
    %v893 = vadd.f32 %v830, 1.0
    %v894 = vadd.f32 %v832, 1.0
    %v895 = vadd.f32 %v834, 1.0
    %v896 = vadd.f32 %v836, 1.0
    %v897 = vadd.f32 %v838, 1.0
    %v898 = vadd.f32 %v840, 1.0
    %v899 = vadd.f32 %v842, 1.0
    %v900 = vadd.f32 %v844, 1.0
    %v901 = vadd.f32 %v846, 1.0
    %v902 = vadd.f32 %v848, 1.0
    %v903 = vadd.f32 %v850, 1.0
    %v904 = vadd.f32 %v852, 1.0
    %v905 = vadd.f32 %v854, 1.0
    %v906 = vadd.f32 %v856, 1.0
    %v907 = vadd.f32 %v858, 1.0
    %v908 = vadd.f32 %v860, 1.0
    %v909 = vadd.f32 %v862, 1.0
    %v910 = vadd.f32 %v864, 1.0
    %v911 = vadd.f32 %v866, 1.0
    %v912 = vadd.f32 %v868, 1.0
    %v913 = vadd.f32 %v870, 1.0
    %v914 = vadd.f32 %v872, 1.0
    %v915 = vadd.f32 %v874, 1.0
    %v916 = vadd.f32 %v876, 1.0
    %v917 = vadd.f32 %v878, 1.0
    %v918 = vadd.f32 %v880, 1.0
    %v919 = vadd.f32 %v882, 1.0
    %v920 = vadd.f32 %v884, 1.0
    %v921 = vadd.f32 %v886, 1.0
    %v922 = vadd.f32 %v888, 1.0
    %v923 = vadd.f32 %v890, 1.0
    %v924 = vadd.f32 %v892, 1.0
    %v925 = vrcp.pop %v893
    %v926 = vrcp.pop %v894
    %v927 = vrcp.pop %v895
    %v928 = vrcp.pop %v896
    %v929 = vrcp.pop %v897
    %v930 = vrcp.pop %v898
    %v931 = vrcp.pop %v899
    %v932 = vrcp.pop %v900
    %v933 = vrcp.pop %v901
    %v934 = vrcp.pop %v902
    %v935 = vrcp.pop %v903
    %v936 = vrcp.pop %v904
    %v937 = vrcp.pop %v905
    %v938 = vrcp.pop %v906
    %v939 = vrcp.pop %v907
    %v940 = vrcp.pop %v908
    %v941 = vrcp.pop %v909
    %v942 = vrcp.pop %v910
    %v943 = vrcp.pop %v911
    %v944 = vrcp.pop %v912
    %v945 = vrcp.pop %v913
    %v946 = vrcp.pop %v914
    %v947 = vrcp.pop %v915
    %v948 = vrcp.pop %v916
    %v949 = vrcp.pop %v917
    %v950 = vrcp.pop %v918
    %v951 = vrcp.pop %v919
    %v952 = vrcp.pop %v920
    %v953 = vrcp.pop %v921
    %v954 = vrcp.pop %v922
    %v955 = vrcp.pop %v923
    %v956 = vrcp.pop %v924
    %v957 = vsub.f32 1.0, %v925
    %v958 = vsub.f32 1.0, %v926
    %v959 = vsub.f32 1.0, %v927
    %v960 = vsub.f32 1.0, %v928
    %v961 = vsub.f32 1.0, %v929
    %v962 = vsub.f32 1.0, %v930
    %v963 = vsub.f32 1.0, %v931
    %v964 = vsub.f32 1.0, %v932
    %v965 = vsub.f32 1.0, %v933
    %v966 = vsub.f32 1.0, %v934
    %v967 = vsub.f32 1.0, %v935
    %v968 = vsub.f32 1.0, %v936
    %v969 = vsub.f32 1.0, %v937
    %v970 = vsub.f32 1.0, %v938
    %v971 = vsub.f32 1.0, %v939
    %v972 = vsub.f32 1.0, %v940
    %v973 = vsub.f32 1.0, %v941
    %v974 = vsub.f32 1.0, %v942
    %v975 = vsub.f32 1.0, %v943
    %v976 = vsub.f32 1.0, %v944
    %v977 = vsub.f32 1.0, %v945
    %v978 = vsub.f32 1.0, %v946
    %v979 = vsub.f32 1.0, %v947
    %v980 = vsub.f32 1.0, %v948
    %v981 = vsub.f32 1.0, %v949
    %v982 = vsub.f32 1.0, %v950
    %v983 = vsub.f32 1.0, %v951
    %v984 = vsub.f32 1.0, %v952
    %v985 = vsub.f32 1.0, %v953
    %v986 = vsub.f32 1.0, %v954
    %v987 = vsub.f32 1.0, %v955
    %v988 = vsub.f32 1.0, %v956
    %v989 = vmul.f32 %v925, %v62
    %v990 = vmul.f32 %v926, %v63
    %v991 = vmul.f32 %v927, %v64
    %v992 = vmul.f32 %v928, %v65
    %v993 = vmul.f32 %v929, %v66
    %v994 = vmul.f32 %v930, %v67
    %v995 = vmul.f32 %v931, %v68
    %v996 = vmul.f32 %v932, %v69
    %v997 = vmul.f32 %v933, %v70
    %v998 = vmul.f32 %v934, %v71
    %v999 = vmul.f32 %v935, %v72
    %v1000 = vmul.f32 %v936, %v73
    %v1001 = vmul.f32 %v937, %v74
    %v1002 = vmul.f32 %v938, %v75
    %v1003 = vmul.f32 %v939, %v76
    %v1004 = vmul.f32 %v940, %v77
    %v1005 = vmul.f32 %v941, %v78
    %v1006 = vmul.f32 %v942, %v79
    %v1007 = vmul.f32 %v943, %v80
    %v1008 = vmul.f32 %v944, %v81
    %v1009 = vmul.f32 %v945, %v82
    %v1010 = vmul.f32 %v946, %v83
    %v1011 = vmul.f32 %v947, %v84
    %v1012 = vmul.f32 %v948, %v85
    %v1013 = vmul.f32 %v949, %v86
    %v1014 = vmul.f32 %v950, %v87
    %v1015 = vmul.f32 %v951, %v88
    %v1016 = vmul.f32 %v952, %v89
    %v1017 = vmul.f32 %v953, %v90
    %v1018 = vmul.f32 %v954, %v91
    %v1019 = vmul.f32 %v955, %v92
    %v1020 = vmul.f32 %v956, %v93
    %v1021 = vmul.f32 %v957, %v94
    %v1022 = vmul.f32 %v958, %v95
    %v1023 = vmul.f32 %v959, %v96
    %v1024 = vmul.f32 %v960, %v97
    %v1025 = vmul.f32 %v961, %v98
    %v1026 = vmul.f32 %v962, %v99
    %v1027 = vmul.f32 %v963, %v100
    %v1028 = vmul.f32 %v964, %v101
    %v1029 = vmul.f32 %v965, %v102
    %v1030 = vmul.f32 %v966, %v103
    %v1031 = vmul.f32 %v967, %v104
    %v1032 = vmul.f32 %v968, %v105
    %v1033 = vmul.f32 %v969, %v106
    %v1034 = vmul.f32 %v970, %v107
    %v1035 = vmul.f32 %v971, %v108
    %v1036 = vmul.f32 %v972, %v109
    %v1037 = vmul.f32 %v973, %v110
    %v1038 = vmul.f32 %v974, %v111
    %v1039 = vmul.f32 %v975, %v112
    %v1040 = vmul.f32 %v976, %v113
    %v1041 = vmul.f32 %v977, %v114
    %v1042 = vmul.f32 %v978, %v115
    %v1043 = vmul.f32 %v979, %v116
    %v1044 = vmul.f32 %v980, %v117
    %v1045 = vmul.f32 %v981, %v118
    %v1046 = vmul.f32 %v982, %v119
    %v1047 = vmul.f32 %v983, %v120
    %v1048 = vmul.f32 %v984, %v121
    %v1049 = vmul.f32 %v985, %v122
    %v1050 = vmul.f32 %v986, %v123
    %v1051 = vmul.f32 %v987, %v124
    %v1052 = vmul.f32 %v988, %v125
    %v1053 = vadd.f32 %v989, %v1021
    %v1054 = vadd.f32 %v990, %v1022
    %v1055 = vadd.f32 %v991, %v1023
    %v1056 = vadd.f32 %v992, %v1024
    %v1057 = vadd.f32 %v993, %v1025
    %v1058 = vadd.f32 %v994, %v1026
    %v1059 = vadd.f32 %v995, %v1027
    %v1060 = vadd.f32 %v996, %v1028
    %v1061 = vadd.f32 %v997, %v1029
    %v1062 = vadd.f32 %v998, %v1030
    %v1063 = vadd.f32 %v999, %v1031
    %v1064 = vadd.f32 %v1000, %v1032
    %v1065 = vadd.f32 %v1001, %v1033
    %v1066 = vadd.f32 %v1002, %v1034
    %v1067 = vadd.f32 %v1003, %v1035
    %v1068 = vadd.f32 %v1004, %v1036
    %v1069 = vadd.f32 %v1005, %v1037
    %v1070 = vadd.f32 %v1006, %v1038
    %v1071 = vadd.f32 %v1007, %v1039
    %v1072 = vadd.f32 %v1008, %v1040
    %v1073 = vadd.f32 %v1009, %v1041
    %v1074 = vadd.f32 %v1010, %v1042
    %v1075 = vadd.f32 %v1011, %v1043
    %v1076 = vadd.f32 %v1012, %v1044
    %v1077 = vadd.f32 %v1013, %v1045
    %v1078 = vadd.f32 %v1014, %v1046
    %v1079 = vadd.f32 %v1015, %v1047
    %v1080 = vadd.f32 %v1016, %v1048
    %v1081 = vadd.f32 %v1017, %v1049
    %v1082 = vadd.f32 %v1018, %v1050
    %v1083 = vadd.f32 %v1019, %v1051
    %v1084 = vadd.f32 %v1020, %v1052
    %1085 = vst [vmem:[#allocation8] sm:$0xff] %v1053
    %1086 = vst [vmem:[#allocation8 + $0x8] sm:$0xff] %v1054
    %1087 = vst [vmem:[#allocation8 + $0x10] sm:$0xff] %v1055
    %1088 = vst [vmem:[#allocation8 + $0x18] sm:$0xff] %v1056
    %1089 = vst [vmem:[#allocation8 + $0x20] sm:$0xff] %v1057
    %1090 = vst [vmem:[#allocation8 + $0x28] sm:$0xff] %v1058
    %1091 = vst [vmem:[#allocation8 + $0x30] sm:$0xff] %v1059
    %1092 = vst [vmem:[#allocation8 + $0x38] sm:$0xff] %v1060
    %1093 = vst [vmem:[#allocation8 + $0x40] sm:$0xff] %v1061
    %1094 = vst [vmem:[#allocation8 + $0x48] sm:$0xff] %v1062
    %1095 = vst [vmem:[#allocation8 + $0x50] sm:$0xff] %v1063
    %1096 = vst [vmem:[#allocation8 + $0x58] sm:$0xff] %v1064
    %1097 = vst [vmem:[#allocation8 + $0x60] sm:$0xff] %v1065
    %1098 = vst [vmem:[#allocation8 + $0x68] sm:$0xff] %v1066
    %1099 = vst [vmem:[#allocation8 + $0x70] sm:$0xff] %v1067
    %1100 = vst [vmem:[#allocation8 + $0x78] sm:$0xff] %v1068
    %1101 = vst [vmem:[#allocation8 + $0x80] sm:$0xff] %v1069
    %1102 = vst [vmem:[#allocation8 + $0x88] sm:$0xff] %v1070
    %1103 = vst [vmem:[#allocation8 + $0x90] sm:$0xff] %v1071
    %1104 = vst [vmem:[#allocation8 + $0x98] sm:$0xff] %v1072
    %1105 = vst [vmem:[#allocation8 + $0xa0] sm:$0xff] %v1073
    %1106 = vst [vmem:[#allocation8 + $0xa8] sm:$0xff] %v1074
    %1107 = vst [vmem:[#allocation8 + $0xb0] sm:$0xff] %v1075
    %1108 = vst [vmem:[#allocation8 + $0xb8] sm:$0xff] %v1076
    %1109 = vst [vmem:[#allocation8 + $0xc0] sm:$0xff] %v1077
    %1110 = vst [vmem:[#allocation8 + $0xc8] sm:$0xff] %v1078
    %1111 = vst [vmem:[#allocation8 + $0xd0] sm:$0xff] %v1079
    %1112 = vst [vmem:[#allocation8 + $0xd8] sm:$0xff] %v1080
    %1113 = vst [vmem:[#allocation8 + $0xe0] sm:$0xff] %v1081
    %1114 = vst [vmem:[#allocation8 + $0xe8] sm:$0xff] %v1082
    %1115 = vst [vmem:[#allocation8 + $0xf0] sm:$0xff] %v1083
    %1116 = vst [vmem:[#allocation8 + $0xf8] sm:$0xff] %v1084
    // Predicated region
    $region34: #{tpu_custom_call.1} parent=1 // pred_check
      _
    $region35: #{tpu_custom_call.1} parent=1 // pred_check_branch
      %1118 = sbr.rel (0) target = $region37
    $region36: #{tpu_custom_call.1} parent=1 // pred_region
      %s1120 = ssub.s32 4096, 4096
      %1121 = vsyncadd [#allocation4], %s1120
      %s1122 = sshll.u32 [#allocation8], 4
      %s1123 = int_to_ptr.vmem [resolvable:$true] %s1122
      %1128 = dma.vmem_to_hbm [thread:$0]  %s1123, 4096, %s5, [#allocation4], 128, 128, 8
    $region37: #{tpu_custom_call.1} parent=1 // pred_fallthru
      _
    // Predicated region
    $region38: #{tpu_custom_call.1} parent=1 // pred_check
      _
    $region39: #{tpu_custom_call.1} parent=1 // pred_check_branch
      %1130 = sbr.rel (0) target = $region41
    $region40: #{tpu_custom_call.1} parent=1 // pred_region
      %1131 = dma.done [#allocation4], 4096
    $region41: #{tpu_custom_call.1} parent=1 // pred_fallthru
      _
    %1132 = vsyncpa [#allocation3], 1
    %1133 = vsyncpa [#allocation6], 1
    %1134 = vsyncpa [#allocation4], 1

</llo_original>
